<compile_context>
chip_gen: v6e
topology: v6e:2x2x1
jax: 0.10.0
libtpu: 0.0.40
codegen_flags: <defaults>
</compile_context>

<pallas_src>
import math

import numpy as np
import jax
import jax.numpy as jnp
from jax import lax
from jax.experimental import pallas as pl
from jax.experimental.pallas import tpu as pltpu


# Fits v7x (64 MiB physical VMEM).  On v5e/v6e (128 MiB) this can be raised to
# ~96 MiB together with tm/tn = 512 tiles.
_VMEM_LIMIT = 48 * 1024 * 1024
_EPS = 1e-6


def _pick_tile(dim, default):
    """Full dim when small (always a legal block), else an (8,128)-aligned
    default with a pl.cdiv grid (Pallas masks the edge blocks)."""
    return dim if dim <= default else default


# ---------------------------------------------------------------------------
# Generic linear:  y = [rmsnorm](x) @ W.T  [+ residual]
# W kept in torch nn.Linear (N, K) layout; K is fully resident (no k axis).
# TODO(synk): add a k-tiled accumulator fallback for K too large for VMEM.
# ---------------------------------------------------------------------------
def _make_linear_kernel(has_norm, has_res):
    def kernel(*refs):
        x_ref, w_ref = refs[0], refs[1]
        i = 2
        g_ref = r_ref = None
        if has_norm:
            g_ref = refs[i]; i += 1
        if has_res:
            r_ref = refs[i]; i += 1
        o_ref = refs[i]

        x = x_ref[...].astype(jnp.float32)
        if has_norm:  # fused RMSNorm: the full K row is resident (tk == K)
            ms = jnp.mean(x * x, axis=-1, keepdims=True)
            x = x * lax.rsqrt(ms + _EPS) * g_ref[...].astype(jnp.float32)
        y = lax.dot_general(x.astype(w_ref.dtype), w_ref[...],
                            (((1,), (1,)), ((), ())),
                            preferred_element_type=jnp.float32)
        if has_res:
            y = y + r_ref[...].astype(jnp.float32)
        o_ref[...] = y.astype(o_ref.dtype)

    return kernel


def pallas_linear(x, w, *, norm_scale=None, residual=None,
                  tm_default=256, tn_default=256):
    M, K = x.shape
    N, K2 = w.shape
    assert K == K2
    tm = _pick_tile(M, tm_default)
    tn = _pick_tile(N, tn_default)
    grid = (pl.cdiv(M, tm), pl.cdiv(N, tn))

    in_specs = [pl.BlockSpec((tm, K), lambda i, j: (i, 0)),
                pl.BlockSpec((tn, K), lambda i, j: (j, 0))]
    args = [x, w]
    if norm_scale is not None:
        in_specs.append(pl.BlockSpec((1, K), lambda i, j: (0, 0)))
        args.append(norm_scale)
    if residual is not None:
        in_specs.append(pl.BlockSpec((tm, tn), lambda i, j: (i, j)))
        args.append(residual)

    return pl.pallas_call(
        _make_linear_kernel(norm_scale is not None, residual is not None),
        out_shape=jax.ShapeDtypeStruct((M, N), x.dtype),
        grid=grid,
        in_specs=in_specs,
        out_specs=pl.BlockSpec((tm, tn), lambda i, j: (i, j)),
        compiler_params=pltpu.CompilerParams(
            dimension_semantics=("parallel", "parallel"),
            vmem_limit_bytes=_VMEM_LIMIT),
    )(*args)


# ---------------------------------------------------------------------------
# Fused RMSNorm + SwiGLU:  y = silu(rmsnorm(x) @ W1.T) * (rmsnorm(x) @ W2.T)
# ---------------------------------------------------------------------------
def _swiglu_kernel(x_ref, w1_ref, w2_ref, g_ref, o_ref):
    x = x_ref[...].astype(jnp.float32)
    ms = jnp.mean(x * x, axis=-1, keepdims=True)
    xn = (x * lax.rsqrt(ms + _EPS) * g_ref[...].astype(jnp.float32)
          ).astype(w1_ref.dtype)
    y1 = lax.dot_general(xn, w1_ref[...], (((1,), (1,)), ((), ())),
                         preferred_element_type=jnp.float32)
    y2 = lax.dot_general(xn, w2_ref[...], (((1,), (1,)), ((), ())),
                         preferred_element_type=jnp.float32)
    o_ref[...] = (y1 * lax.logistic(y1) * y2).astype(o_ref.dtype)


def pallas_swiglu(x, w1, w2, norm_scale, *, tm_default=256, tn_default=256):
    M, K = x.shape
    N = w1.shape[0]
    assert w1.shape == w2.shape and w1.shape[1] == K
    tm = _pick_tile(M, tm_default)
    tn = _pick_tile(N, tn_default)
    grid = (pl.cdiv(M, tm), pl.cdiv(N, tn))

    return pl.pallas_call(
        _swiglu_kernel,
        out_shape=jax.ShapeDtypeStruct((M, N), x.dtype),
        grid=grid,
        in_specs=[pl.BlockSpec((tm, K), lambda i, j: (i, 0)),
                  pl.BlockSpec((tn, K), lambda i, j: (j, 0)),
                  pl.BlockSpec((tn, K), lambda i, j: (j, 0)),
                  pl.BlockSpec((1, K), lambda i, j: (0, 0))],
        out_specs=pl.BlockSpec((tm, tn), lambda i, j: (i, j)),
        compiler_params=pltpu.CompilerParams(
            dimension_semantics=("parallel", "parallel"),
            vmem_limit_bytes=_VMEM_LIMIT),
    )(x, w1, w2, norm_scale)


# ---------------------------------------------------------------------------
# Fused RMSNorm + QKV projection + RoPE, writing (B, 3*n_head, T, hd) layout.
# Grid: (batch, 3*n_head); group j<H -> q head j, H<=j<2H -> k, else v.
# ---------------------------------------------------------------------------
def _rotate_half(y, hd2):
    # Swap the two halves of the last dim: XLU roll when lane-aligned,
    # otherwise a static-slice concat (small head dims).
    if (2 * hd2) % 128 == 0:
        return pltpu.roll(y, shift=hd2, axis=1)
    return jnp.concatenate([y[:, hd2:], y[:, :hd2]], axis=1)


def _make_qkv_kernel(n_head, hd):
    hd2 = hd // 2

    def kernel(x_ref, w_ref, g_ref, cos_ref, sin_ref, o_ref):
        # fused RMSNorm (f32 math) on the resident (T, D) activation block
        x = x_ref[...].astype(jnp.float32)
        ms = jnp.mean(x * x, axis=-1, keepdims=True)
        xn = (x * lax.rsqrt(ms + _EPS) * g_ref[...].astype(jnp.float32)
              ).astype(w_ref.dtype)
        y = lax.dot_general(xn, w_ref[...], (((1,), (1,)), ((), ())),
                            preferred_element_type=jnp.float32)      # (T, hd)

        j = pl.program_id(1)

        @pl.when(j < 2 * n_head)      # q / k heads: apply RoPE (half-split)
        def _():
            rot = _rotate_half(y, hd2)
            o_ref[0, 0] = (y * cos_ref[...] + rot * sin_ref[...]
                           ).astype(o_ref.dtype)

        @pl.when(j >= 2 * n_head)     # v heads: store as-is
        def _():
            o_ref[0, 0] = y.astype(o_ref.dtype)

    return kernel


def pallas_qkv_proj(x2d, w_attn, g_att, cosf, sinf, *, batch, n_head):
    M, D = x2d.shape
    assert M % batch == 0
    T = M // batch
    hd = D // n_head
    # TODO(synk): tile T for very long sequences (full (T, D) block here).
    return pl.pallas_call(
        _make_qkv_kernel(n_head, hd),
        out_shape=jax.ShapeDtypeStruct((batch, 3 * n_head, T, hd), x2d.dtype),
        grid=(batch, 3 * n_head),
        in_specs=[pl.BlockSpec((T, D), lambda b, j: (b, 0)),
                  pl.BlockSpec((hd, D), lambda b, j: (j, 0)),
                  pl.BlockSpec((1, D), lambda b, j: (0, 0)),
                  pl.BlockSpec((T, hd), lambda b, j: (0, 0)),
                  pl.BlockSpec((T, hd), lambda b, j: (0, 0))],
        out_specs=pl.BlockSpec((1, 1, T, hd), lambda b, j: (b, j, 0, 0)),
        compiler_params=pltpu.CompilerParams(
            dimension_semantics=("parallel", "parallel"),
            vmem_limit_bytes=_VMEM_LIMIT),
    )(x2d, w_attn, g_att, cosf, sinf)


# ---------------------------------------------------------------------------
# Flash-style causal attention.  Grid (B, n_head, kv_tiles); online softmax.
# qkv layout: (B, 3*n_head, T, hd) with groups [q heads | k heads | v heads].
# ---------------------------------------------------------------------------
def _make_flash_kernel(scale, tkv):
    def kernel(q_ref, k_ref, v_ref, o_ref, m_ref, l_ref, acc_ref):
        kv = pl.program_id(2)

        @pl.when(kv == 0)
        def _():
            m_ref[...] = jnp.full_like(m_ref, -1e30)
            l_ref[...] = jnp.zeros_like(l_ref)
            acc_ref[...] = jnp.zeros_like(acc_ref)

        q = q_ref[0, 0]
        k = k_ref[0, 0]
        v = v_ref[0, 0]
        s = lax.dot_general(q, k, (((1,), (1,)), ((), ())),
                            preferred_element_type=jnp.float32) * scale
        # In-kernel causal mask (also masks out-of-bounds kv columns).
        row = lax.broadcasted_iota(jnp.int32, s.shape, 0)
        col = lax.broadcasted_iota(jnp.int32, s.shape, 1) + kv * tkv
        s = jnp.where(row >= col, s, -1e30)

        m_prev = m_ref[...]
        m_new = jnp.maximum(m_prev, jnp.max(s, axis=-1, keepdims=True))
        alpha = jnp.exp(m_prev - m_new)
        p = jnp.exp(s - m_new)
        l_ref[...] = alpha * l_ref[...] + jnp.sum(p, axis=-1, keepdims=True)
        acc_ref[...] = alpha * acc_ref[...] + jnp.dot(
            p.astype(v.dtype), v, preferred_element_type=jnp.float32)
        m_ref[...] = m_new

        @pl.when(kv == pl.num_programs(2) - 1)
        def _():
            o_ref[0, 0] = (acc_ref[...] *
                           pl.reciprocal(l_ref[...], approx=True)
                           ).astype(o_ref.dtype)

    return kernel


def pallas_attention(qkv, *, n_head, tkv_default=512):
    B, _, T, hd = qkv.shape
    tkv = _pick_tile(T, tkv_default)
    nkv = pl.cdiv(T, tkv)
    scale = 1.0 / math.sqrt(hd)
    # TODO(synk): also tile the q axis for very long T (q block is full T).
    return pl.pallas_call(
        _make_flash_kernel(scale, tkv),
        out_shape=jax.ShapeDtypeStruct((B, n_head, T, hd), qkv.dtype),
        grid=(B, n_head, nkv),
        in_specs=[
            pl.BlockSpec((1, 1, T, hd), lambda b, h, kv: (b, h, 0, 0)),
            pl.BlockSpec((1, 1, tkv, hd),
                         lambda b, h, kv: (b, n_head + h, kv, 0)),
            pl.BlockSpec((1, 1, tkv, hd),
                         lambda b, h, kv: (b, 2 * n_head + h, kv, 0)),
        ],
        out_specs=pl.BlockSpec((1, 1, T, hd), lambda b, h, kv: (b, h, 0, 0)),
        scratch_shapes=[pltpu.VMEM((T, 1), jnp.float32),
                        pltpu.VMEM((T, 1), jnp.float32),
                        pltpu.VMEM((T, hd), jnp.float32)],
        compiler_params=pltpu.CompilerParams(
            dimension_semantics=("parallel", "parallel", "arbitrary"),
            vmem_limit_bytes=_VMEM_LIMIT),
    )(qkv, qkv, qkv)


# ---------------------------------------------------------------------------
# Attention output projection (c_proj) + residual, with the head axis as the
# contraction grid axis.  Reads attn in (B, H, T, hd) layout, w_proj in
# (H, D, hd) layout -- the transpose back to (B*T, D) is folded into the
# BlockSpecs, never materialized in HBM.
# ---------------------------------------------------------------------------
def _outproj_kernel(a_ref, w_ref, r_ref, o_ref, acc_ref):
    h = pl.program_id(2)

    @pl.when(h == 0)
    def _():
        acc_ref[...] = jnp.zeros_like(acc_ref)

    acc_ref[...] += lax.dot_general(
        a_ref[0, 0].astype(w_ref.dtype), w_ref[0],
        (((1,), (1,)), ((), ())), preferred_element_type=jnp.float32)

    @pl.when(h == pl.num_programs(2) - 1)
    def _():
        o_ref[...] = (acc_ref[...] + r_ref[...].astype(jnp.float32)
                      ).astype(o_ref.dtype)


def pallas_attn_out_proj(attn, w_proj3, residual, *, tn_default=256):
    B, H, T, hd = attn.shape
    _, D, _ = w_proj3.shape
    tn = _pick_tile(D, tn_default)
    grid = (B, pl.cdiv(D, tn), H)

    return pl.pallas_call(
        _outproj_kernel,
        out_shape=jax.ShapeDtypeStruct((B * T, D), residual.dtype),
        grid=grid,
        in_specs=[pl.BlockSpec((1, 1, T, hd), lambda b, j, h: (b, h, 0, 0)),
                  pl.BlockSpec((1, tn, hd), lambda b, j, h: (h, j, 0)),
                  pl.BlockSpec((T, tn), lambda b, j, h: (b, j))],
        out_specs=pl.BlockSpec((T, tn), lambda b, j, h: (b, j)),
        scratch_shapes=[pltpu.VMEM((T, tn), jnp.float32)],
        compiler_params=pltpu.CompilerParams(
            dimension_semantics=("parallel", "parallel", "arbitrary"),
            vmem_limit_bytes=_VMEM_LIMIT),
    )(attn, w_proj3, residual)


# ---------------------------------------------------------------------------
# One-time parameter preparation (outside the forward pass).
# ---------------------------------------------------------------------------
def prepare_block_params(w_attn, w_proj, w_fc1, w_fc2, w_cproj,
                         g_att, g_ffn, *, n_head, dtype=None):
    """The q/k rows of c_attn are permuted per head from interleaved rope-pair
    order to half-split order so in-kernel RoPE is a rotate-half; q.k^T is
    invariant to this common feature permutation.  w_proj is reshaped to
    (H, D, hd) so the attention-output head axis is a blockable leading dim.
    Norm scales stay f32; matmul weights are optionally cast to `dtype`."""
    D = w_proj.shape[0]
    assert D % n_head == 0
    hd = D // n_head
    assert hd % 2 == 0
    per_head = np.concatenate([np.arange(0, hd, 2), np.arange(1, hd, 2)])
    perm = jnp.asarray(np.concatenate([h * hd + per_head
                                       for h in range(n_head)]))
    w_q = w_attn[:D][perm]
    w_k = w_attn[D:2 * D][perm]
    w_v = w_attn[2 * D:]
    w_attn_p = jnp.concatenate([w_q, w_k, w_v], axis=0)
    w_proj3 = w_proj.reshape(D, n_head, hd).transpose(1, 0, 2)     # (H, D, hd)

    if dtype is not None:
        w_attn_p, w_proj3, w_fc1, w_fc2, w_cproj = (
            t.astype(dtype) for t in (w_attn_p, w_proj3, w_fc1, w_fc2, w_cproj))
    return dict(w_attn=w_attn_p, w_proj=w_proj3,
                w_fc1=w_fc1, w_fc2=w_fc2, w_cproj=w_cproj,
                g_att=g_att.reshape(1, D).astype(jnp.float32),
                g_ffn=g_ffn.reshape(1, D).astype(jnp.float32))


def block_forward(x, rope, mask, params, *, n_head):
    """Pallas forward of `Block`."""
    del mask  # causal mask regenerated in-kernel.
    # TODO(synk): arbitrary (non-causal) attention masks are not plumbed in.
    B, T, D = x.shape
    x2d = x.reshape(B * T, D)

    # Full-width RoPE tables in half-split layout (tiny wrapper-side op).
    cos = rope[:T, :, 0].astype(jnp.float32)
    sin = rope[:T, :, 1].astype(jnp.float32)
    cosf = jnp.concatenate([cos, cos], axis=-1)                    # (T, hd)
    sinf = jnp.concatenate([-sin, sin], axis=-1)                   # (T, hd)

    # attention branch: fused norm+qkv(+rope) -> flash attn -> proj+residual
    qkv = pallas_qkv_proj(x2d, params["w_attn"], params["g_att"],
                          cosf, sinf, batch=B, n_head=n_head)
    attn = pallas_attention(qkv, n_head=n_head)
    h = pallas_attn_out_proj(attn, params["w_proj"], x2d)

    # MLP branch: fused norm+SwiGLU -> proj+residual
    g = pallas_swiglu(h, params["w_fc1"], params["w_fc2"], params["g_ffn"])
    out = pallas_linear(g, params["w_cproj"], residual=h)
    return out.reshape(B, T, D)


# ---------------------------------------------------------------------------
# Pure-JAX reference mirroring the PyTorch module (for the sanity check)
# ---------------------------------------------------------------------------
def _ref_block_forward(x, rope, mask, w_attn, w_proj, w_fc1, w_fc2, w_cproj,
                       g_att, g_ffn, n_head):
    eps = 1e-6
    B, T, D = x.shape
    hd = D // n_head

    def rms(t, g):
        return t * lax.rsqrt(jnp.mean(t * t, axis=-1, keepdims=True) + eps) * g

    def rope_apply(t):
        ts = t.reshape(B, T, n_head, hd // 2, 2)
        rc = rope[:T].reshape(1, T, 1, hd // 2, 2)
        o0 = ts[..., 0] * rc[..., 0] - ts[..., 1] * rc[..., 1]
        o1 = ts[..., 1] * rc[..., 0] + ts[..., 0] * rc[..., 1]
        return jnp.stack([o0, o1], -1).reshape(B, T, n_head, hd)

    xn = rms(x, g_att)
    qkv = xn @ w_attn.T
    q, k, v = jnp.split(qkv, 3, axis=-1)
    q = q.reshape(B, T, n_head, hd)
    k = k.reshape(B, T, n_head, hd)
    v = v.reshape(B, T, n_head, hd)
    q = rope_apply(q).transpose(0, 2, 1, 3)
    k = rope_apply(k).transpose(0, 2, 1, 3)
    v = v.transpose(0, 2, 1, 3)
    scores = jnp.einsum("bhqd,bhkd->bhqk", q, k) / math.sqrt(hd)
    scores = jnp.where(mask, scores, -jnp.inf)
    attn = jax.nn.softmax(scores, axis=-1)
    o = jnp.einsum("bhqk,bhkd->bhqd", attn, v)
    o = o.transpose(0, 2, 1, 3).reshape(B, T, D)
    h = x + o @ w_proj.T

    hn = rms(h, g_ffn)
    ff = jax.nn.silu(hn @ w_fc1.T) * (hn @ w_fc2.T)
    return h + ff @ w_cproj.T


# ---------------------------------------------------------------------------
if __name__ == "__main__":
    B, T, D, H = 2, 8, 32, 4
    hd = D // H
    n_hidden = int(2 * (4 * D) / 3)

    key = jax.random.PRNGKey(0)
    ks = jax.random.split(key, 8)
    x = jax.random.normal(ks[0], (B, T, D), dtype=jnp.float32)
    w_attn = jax.random.normal(ks[1], (3 * D, D), dtype=jnp.float32) * 0.02
    w_proj = jax.random.normal(ks[2], (D, D), dtype=jnp.float32) * 0.02
    w_fc1 = jax.random.normal(ks[3], (n_hidden, D), dtype=jnp.float32) * 0.02
    w_fc2 = jax.random.normal(ks[4], (n_hidden, D), dtype=jnp.float32) * 0.02
    w_cproj = jax.random.normal(ks[5], (D, n_hidden), dtype=jnp.float32) * 0.02
    g_att = 1.0 + 0.1 * jax.random.normal(ks[6], (D,), dtype=jnp.float32)
    g_ffn = 1.0 + 0.1 * jax.random.normal(ks[7], (D,), dtype=jnp.float32)

    # rope cache: (T, hd/2, 2) = [cos, sin]
    inv_freq = 1.0 / (10000.0 ** (jnp.arange(0, hd, 2, dtype=jnp.float32) / hd))
    pos = jnp.arange(T, dtype=jnp.float32)
    ang = pos[:, None] * inv_freq[None, :]
    rope = jnp.stack([jnp.cos(ang), jnp.sin(ang)], axis=-1)

    # causal bool mask, (1, 1, T, T)
    mask = jnp.tril(jnp.ones((T, T), dtype=bool)).reshape(1, 1, T, T)

    ref = _ref_block_forward(x, rope, mask, w_attn, w_proj, w_fc1, w_fc2,
                             w_cproj, g_att, g_ffn, H)

    # ---- f32 run (exactly mirrors the torch module's math) ----------------
    params = prepare_block_params(w_attn, w_proj, w_fc1, w_fc2, w_cproj,
                                  g_att, g_ffn, n_head=H)
    out = jax.block_until_ready(block_forward(x, rope, mask, params, n_head=H))
    assert out.shape == (B, T, D)
    err = float(jnp.max(jnp.abs(out - ref)))
    assert jnp.allclose(out, ref, atol=2e-3, rtol=2e-3), f"f32 max err {err}"

    # ---- bf16 run (bf16 MXU inputs, f32 accumulation / norm / softmax) ----
    params_bf = prepare_block_params(w_attn, w_proj, w_fc1, w_fc2, w_cproj,
                                     g_att, g_ffn, n_head=H,
                                     dtype=jnp.bfloat16)
    out_bf = jax.block_until_ready(
        block_forward(x.astype(jnp.bfloat16), rope, mask, params_bf, n_head=H))
    err_bf = float(jnp.max(jnp.abs(out_bf.astype(jnp.float32) - ref)))
    assert err_bf < 8e-2, f"bf16 max err {err_bf}"

    print("KERNEL_OK")
</pallas_src>

<mosaic_0001>
module attributes {stable_mosaic.version = 11 : i64} {
  func.func @kernel(%arg0: i32, %arg1: i32, %arg2: memref<8x32xf32, #tpu.memory_space<vmem>>, %arg3: memref<8x32xf32, #tpu.memory_space<vmem>>, %arg4: memref<1x32xf32, #tpu.memory_space<vmem>>, %arg5: memref<8x8xf32, #tpu.memory_space<vmem>>, %arg6: memref<8x8xf32, #tpu.memory_space<vmem>>, %arg7: memref<1x1x8x8xf32, #tpu.memory_space<vmem>>) attributes {dimension_semantics = [#tpu.dimension_semantics<parallel>, #tpu.dimension_semantics<parallel>], iteration_bounds = array<i64: 2, 12>, scalar_prefetch = 0 : i64, scratch_operands = 0 : i64, tpu.core_type = #tpu.core_type<tc>, window_params = [{transform_indices = @transform_0, window_bounds = array<i64: 8, 32>}, {transform_indices = @transform_1, window_bounds = array<i64: 8, 32>}, {pipeline_mode = #tpu.pipeline_mode<synchronous>, transform_indices = @transform_2, window_bounds = array<i64: 1, 32>}, {pipeline_mode = #tpu.pipeline_mode<synchronous>, transform_indices = @transform_3, window_bounds = array<i64: 8, 8>}, {pipeline_mode = #tpu.pipeline_mode<synchronous>, transform_indices = @transform_4, window_bounds = array<i64: 8, 8>}, {transform_indices = @transform_5, window_bounds = array<i64: 1, 1, 8, 8>}]} {
    %c0 = arith.constant 0 : index
    %c0_0 = arith.constant 0 : index
    %0 = vector.load %arg2[%c0, %c0_0] : memref<8x32xf32, #tpu.memory_space<vmem>>, vector<8x32xf32>
    %1 = arith.mulf %0, %0 : vector<8x32xf32>
    %cst = arith.constant dense<0.000000e+00> : vector<8xf32>
    %2 = vector.multi_reduction <add>, %1, %cst [1] : vector<8x32xf32> to vector<8xf32>
    %3 = vector.shape_cast %2 : vector<8xf32> to vector<8x1xf32>
    %cst_1 = arith.constant 3.200000e+01 : f32
    %4 = vector.broadcast %cst_1 : f32 to vector<8x1xf32>
    %5 = arith.divf %3, %4 : vector<8x1xf32>
    %cst_2 = arith.constant 9.99999997E-7 : f32
    %6 = vector.broadcast %cst_2 : f32 to vector<8x1xf32>
    %7 = arith.addf %5, %6 : vector<8x1xf32>
    %8 = math.rsqrt %7 : vector<8x1xf32>
    %9 = vector.broadcast %8 : vector<8x1xf32> to vector<8x32xf32>
    %10 = arith.mulf %0, %9 : vector<8x32xf32>
    %c0_3 = arith.constant 0 : index
    %c0_4 = arith.constant 0 : index
    %11 = vector.load %arg4[%c0_3, %c0_4] : memref<1x32xf32, #tpu.memory_space<vmem>>, vector<1x32xf32>
    %12 = vector.broadcast %11 : vector<1x32xf32> to vector<8x32xf32>
    %13 = arith.mulf %10, %12 : vector<8x32xf32>
    %c0_5 = arith.constant 0 : index
    %c0_6 = arith.constant 0 : index
    %14 = vector.load %arg3[%c0_5, %c0_6] : memref<8x32xf32, #tpu.memory_space<vmem>>, vector<8x32xf32>
    %cst_7 = arith.constant dense<0.000000e+00> : vector<8x8xf32>
    %15 = tpu.matmul %13, %14, %cst_7 {dimension_numbers = #tpu.dot_dimension_numbers<[1], [1], [0], [0], [0, 0, 1, 0], [], []>} : vector<8x32xf32>, vector<8x32xf32>, vector<8x8xf32> -> vector<8x8xf32>
    %c8_i32 = arith.constant 8 : i32
    %16 = arith.cmpi slt, %arg1, %c8_i32 : i32
    %17 = arith.extui %16 : i1 to i32
    %c0_i32 = arith.constant 0 : i32
    %18 = arith.cmpi ne, %17, %c0_i32 : i32
    scf.if %18 {
      %22 = vector.extract_strided_slice %15 {offsets = [0, 4], sizes = [8, 4], strides = [1, 1]} : vector<8x8xf32> to vector<8x4xf32>
      %23 = vector.extract_strided_slice %15 {offsets = [0, 0], sizes = [8, 4], strides = [1, 1]} : vector<8x8xf32> to vector<8x4xf32>
      %24 = tpu.concatenate %22, %23 in 1 : vector<8x4xf32>, vector<8x4xf32> -> vector<8x8xf32>
      %c0_10 = arith.constant 0 : index
      %c0_11 = arith.constant 0 : index
      %25 = vector.load %arg5[%c0_10, %c0_11] : memref<8x8xf32, #tpu.memory_space<vmem>>, vector<8x8xf32>
      %26 = arith.mulf %15, %25 : vector<8x8xf32>
      %c0_12 = arith.constant 0 : index
      %c0_13 = arith.constant 0 : index
      %27 = vector.load %arg6[%c0_12, %c0_13] : memref<8x8xf32, #tpu.memory_space<vmem>>, vector<8x8xf32>
      %28 = arith.mulf %24, %27 : vector<8x8xf32>
      %29 = arith.addf %26, %28 : vector<8x8xf32>
      %c0_14 = arith.constant 0 : index
      %c0_15 = arith.constant 0 : index
      %c0_16 = arith.constant 0 : index
      %c0_17 = arith.constant 0 : index
      %30 = vector.load %arg7[%c0_14, %c0_15, %c0_16, %c0_17] : memref<1x1x8x8xf32, #tpu.memory_space<vmem>>, vector<1x1x8x8xf32>
      %31 = vector.shape_cast %30 : vector<1x1x8x8xf32> to vector<8x8xf32>
      %32 = vector.shape_cast %29 : vector<8x8xf32> to vector<1x1x8x8xf32>
      tpu.vector_store %arg7[%c0_14, %c0_15, %c0_16, %c0_17], %32 {strides = array<i32>} : memref<1x1x8x8xf32, #tpu.memory_space<vmem>>, vector<1x1x8x8xf32>,
    } else {
    }
    %c8_i32_8 = arith.constant 8 : i32
    %19 = arith.cmpi sge, %arg1, %c8_i32_8 : i32
    %20 = arith.extui %19 : i1 to i32
    %c0_i32_9 = arith.constant 0 : i32
    %21 = arith.cmpi ne, %20, %c0_i32_9 : i32
    scf.if %21 {
      %c0_10 = arith.constant 0 : index
      %c0_11 = arith.constant 0 : index
      %c0_12 = arith.constant 0 : index
      %c0_13 = arith.constant 0 : index
      %22 = vector.load %arg7[%c0_10, %c0_11, %c0_12, %c0_13] : memref<1x1x8x8xf32, #tpu.memory_space<vmem>>, vector<1x1x8x8xf32>
      %23 = vector.shape_cast %22 : vector<1x1x8x8xf32> to vector<8x8xf32>
      %24 = vector.shape_cast %15 : vector<8x8xf32> to vector<1x1x8x8xf32>
      tpu.vector_store %arg7[%c0_10, %c0_11, %c0_12, %c0_13], %24 {strides = array<i32>} : memref<1x1x8x8xf32, #tpu.memory_space<vmem>>, vector<1x1x8x8xf32>,
    } else {
    }
    return
  }
  func.func @transform_0(%arg0: i32, %arg1: i32) -> (i32, i32) {
    %c0_i32 = arith.constant 0 : i32
    %c0_i32_0 = arith.constant 0 : i32
    return %arg0, %c0_i32 : i32, i32
  }
  func.func @transform_1(%arg0: i32, %arg1: i32) -> (i32, i32) {
    %c0_i32 = arith.constant 0 : i32
    %c0_i32_0 = arith.constant 0 : i32
    return %arg1, %c0_i32 : i32, i32
  }
  func.func @transform_2(%arg0: i32, %arg1: i32) -> (i32, i32) {
    %c0_i32 = arith.constant 0 : i32
    %c0_i32_0 = arith.constant 0 : i32
    %c0_i32_1 = arith.constant 0 : i32
    return %c0_i32, %c0_i32_0 : i32, i32
  }
  func.func @transform_3(%arg0: i32, %arg1: i32) -> (i32, i32) {
    %c0_i32 = arith.constant 0 : i32
    %c0_i32_0 = arith.constant 0 : i32
    %c0_i32_1 = arith.constant 0 : i32
    return %c0_i32, %c0_i32_0 : i32, i32
  }
  func.func @transform_4(%arg0: i32, %arg1: i32) -> (i32, i32) {
    %c0_i32 = arith.constant 0 : i32
    %c0_i32_0 = arith.constant 0 : i32
    %c0_i32_1 = arith.constant 0 : i32
    return %c0_i32, %c0_i32_0 : i32, i32
  }
  func.func @transform_5(%arg0: i32, %arg1: i32) -> (i32, i32, i32, i32) {
    %c0_i32 = arith.constant 0 : i32
    %c0_i32_0 = arith.constant 0 : i32
    %c0_i32_1 = arith.constant 0 : i32
    return %arg0, %arg1, %c0_i32, %c0_i32_0 : i32, i32, i32, i32
  }
}

</mosaic_0001>

<llo_original>
// kernel: tpu_custom_call.1
$region0: #{tpu_custom_call.1}
  #allocation0 [shape = 'u32[]', space=smem, size = 0x4, offset = 0x4, fixed_abs, tag = 'smem constant byte address 0x4 - core index']
  #allocation1 [shape = 'u32[144,128]{1,0:T(1,128)}', space=vmem, size = 0x12000, scoped, tag = 'internal scratch']
  %s0 = inlined_call_operand.vmem [shape: f32[16,32], index: 0, kind: input, shape index: {}]
  %s1 = inlined_call_operand.vmem [shape: f32[96,32], index: 1, kind: input, shape index: {}]
  %s2 = inlined_call_operand.vmem [shape: f32[1,32], index: 2, kind: input, shape index: {}]
  %s3 = inlined_call_operand.vmem [shape: f32[8,8], index: 3, kind: input, shape index: {}]
  %s4 = inlined_call_operand.vmem [shape: f32[8,8], index: 4, kind: input, shape index: {}]
  %s5 = inlined_call_operand.vmem [shape: f32[2,12,8,8], index: 5, kind: output, shape index: {}]
  %s6 = sld [smem:[#allocation0]]
  $region61: #{tpu_custom_call.1} parent=0
    _
  %s8 = ssub.s32 1, %s6
  %s9 = scalar_select 0, %s8, %s6
  loop: start=0, step=1, limit=26
  $region2: #{tpu_custom_call.1} parent=0 // loop_pre_header
    _
  $region3: #{tpu_custom_call.1} parent=0 // loop_header
    %s11 = sphi 0, %s15
    %p12 = scmp.ge.s32.totalorder %s11, 26
    %s18 = sphi 0, %s30
    %s19 = sphi 0, %s26
    %s20 = sphi 0, %s18
    %s21 = sphi 0, %s19
    %s22 = sphi 0, %s20
    %s23 = sphi 0, %s21
    %s33 = sphi 0, %s35
    %s36 = sphi 0, %s33
    %s37 = sphi 0, %s36
    %s53 = sphi 0, %s37
    %s59 = sphi 0, %s61
    %s62 = sphi 0, %s59
    %s63 = sphi 0, %s62
    %s79 = sphi 0, %s63
    %s83 = sphi 0, %s83
    %s85 = sphi 0, %s83
    %s86 = sphi 0, %s85
    %s100 = sphi 0, %s86
    %s104 = sphi 0, %s104
    %s106 = sphi 0, %s104
    %s107 = sphi 0, %s106
    %s121 = sphi 0, %s107
    %s125 = sphi 0, %s125
    %s127 = sphi 0, %s125
    %s128 = sphi 0, %s127
    %s142 = sphi 0, %s128
    %s150 = sphi 0, %s152
    %s153 = sphi 0, %s150
    %s154 = sphi 0, %s153
    %s170 = sphi 0, %s154
  $region4: #{tpu_custom_call.1} parent=0 // loop_header_branch
    %14 = sbr.rel (%p12) target = $region8
  $region5: #{tpu_custom_call.1} parent=0 // loop_body
    %s16 = ssub.s32 %s11, 1
    %s17 = ssub.s32 %s11, 2
    %s24 = sadd.s32 1, %s19
    %p25 = scmp.ge.s32.totalorder %s24, 12
    %s26 = scalar_select %p25, 0, %s24
    %s27 = sadd.s32 1, %s18
    %s28 = scalar_select %p25, %s27, %s18
    %p29 = scmp.ge.s32.totalorder %s28, 2
    %s30 = scalar_select %p29, 0, %s28
    %s31 = ssub.s32 %s18, %s30
    %p32 = scmp.eq.s32.totalorder %s31, 0
    %s34 = sadd.s32 %s33, 1
    %s35 = scalar_select %p32, %s33, %s34
    %p38 = pneg %p32
    %p39 = scmp.eq.s32.totalorder %s11, 23
    %p40 = por %p38, %p39
    %p41 = scmp.ne.s32.totalorder %s33, %s36
    %p42 = scmp.eq.s32.totalorder %s11, 0
    %p43 = por %p41, %p42
    %p44 = scmp.ne.s32.totalorder %s33, %s36
    %p45 = scmp.eq.s32.totalorder %s16, 23
    %p46 = por %p44, %p45
    %p47 = scmp.ne.s32.totalorder %s36, %s37
    %p48 = scmp.eq.s32.totalorder %s16, 0
    %p49 = por %p47, %p48
    %p50 = scmp.ne.s32.totalorder %s36, %s37
    %p51 = scmp.eq.s32.totalorder %s17, 23
    %p52 = por %p50, %p51
    %p54 = scmp.ne.s32.totalorder %s37, %s53
    %p55 = scmp.eq.s32.totalorder %s17, 0
    %p56 = por %p54, %p55
    %s57 = ssub.s32 %s19, %s26
    %p58 = scmp.eq.s32.totalorder %s57, 0
    %s60 = sadd.s32 %s59, 1
    %s61 = scalar_select %p58, %s59, %s60
    %p64 = pneg %p58
    %p65 = scmp.eq.s32.totalorder %s11, 23
    %p66 = por %p64, %p65
    %p67 = scmp.ne.s32.totalorder %s59, %s62
    %p68 = scmp.eq.s32.totalorder %s11, 0
    %p69 = por %p67, %p68
    %p70 = scmp.ne.s32.totalorder %s59, %s62
    %p71 = scmp.eq.s32.totalorder %s16, 23
    %p72 = por %p70, %p71
    %p73 = scmp.ne.s32.totalorder %s62, %s63
    %p74 = scmp.eq.s32.totalorder %s16, 0
    %p75 = por %p73, %p74
    %p76 = scmp.ne.s32.totalorder %s62, %s63
    %p77 = scmp.eq.s32.totalorder %s17, 23
    %p78 = por %p76, %p77
    %p80 = scmp.ne.s32.totalorder %s63, %s79
    %p81 = scmp.eq.s32.totalorder %s17, 0
    %p82 = por %p80, %p81
    %s84 = sadd.s32 %s83, 1
    %p87 = scmp.eq.s32.totalorder %s11, 23
    %p88 = scmp.ne.s32.totalorder %s83, %s85
    %p89 = scmp.eq.s32.totalorder %s11, 0
    %p90 = por %p88, %p89
    %p91 = scmp.ne.s32.totalorder %s83, %s85
    %p92 = scmp.eq.s32.totalorder %s16, 23
    %p93 = por %p91, %p92
    %p94 = scmp.ne.s32.totalorder %s85, %s86
    %p95 = scmp.eq.s32.totalorder %s16, 0
    %p96 = por %p94, %p95
    %p97 = scmp.ne.s32.totalorder %s85, %s86
    %p98 = scmp.eq.s32.totalorder %s17, 23
    %p99 = por %p97, %p98
    %p101 = scmp.ne.s32.totalorder %s86, %s100
    %p102 = scmp.eq.s32.totalorder %s17, 0
    %p103 = por %p101, %p102
    %s105 = sadd.s32 %s104, 1
    %p108 = scmp.eq.s32.totalorder %s11, 23
    %p109 = scmp.ne.s32.totalorder %s104, %s106
    %p110 = scmp.eq.s32.totalorder %s11, 0
    %p111 = por %p109, %p110
    %p112 = scmp.ne.s32.totalorder %s104, %s106
    %p113 = scmp.eq.s32.totalorder %s16, 23
    %p114 = por %p112, %p113
    %p115 = scmp.ne.s32.totalorder %s106, %s107
    %p116 = scmp.eq.s32.totalorder %s16, 0
    %p117 = por %p115, %p116
    %p118 = scmp.ne.s32.totalorder %s106, %s107
    %p119 = scmp.eq.s32.totalorder %s17, 23
    %p120 = por %p118, %p119
    %p122 = scmp.ne.s32.totalorder %s107, %s121
    %p123 = scmp.eq.s32.totalorder %s17, 0
    %p124 = por %p122, %p123
    %s126 = sadd.s32 %s125, 1
    %p129 = scmp.eq.s32.totalorder %s11, 23
    %p130 = scmp.ne.s32.totalorder %s125, %s127
    %p131 = scmp.eq.s32.totalorder %s11, 0
    %p132 = por %p130, %p131
    %p133 = scmp.ne.s32.totalorder %s125, %s127
    %p134 = scmp.eq.s32.totalorder %s16, 23
    %p135 = por %p133, %p134
    %p136 = scmp.ne.s32.totalorder %s127, %s128
    %p137 = scmp.eq.s32.totalorder %s16, 0
    %p138 = por %p136, %p137
    %p139 = scmp.ne.s32.totalorder %s127, %s128
    %p140 = scmp.eq.s32.totalorder %s17, 23
    %p141 = por %p139, %p140
    %p143 = scmp.ne.s32.totalorder %s128, %s142
    %p144 = scmp.eq.s32.totalorder %s17, 0
    %p145 = por %p143, %p144
    %s146 = ssub.s32 %s18, %s30
    %s147 = ssub.s32 %s19, %s26
    %s148 = sor.u32 %s146, %s147
    %p149 = scmp.eq.s32.totalorder %s148, 0
    %s151 = sadd.s32 %s150, 1
    %s152 = scalar_select %p149, %s150, %s151
    %p155 = pneg %p149
    %p156 = scmp.eq.s32.totalorder %s11, 23
    %p157 = por %p155, %p156
    %p158 = scmp.ne.s32.totalorder %s150, %s153
    %p159 = scmp.eq.s32.totalorder %s11, 0
    %p160 = por %p158, %p159
    %p161 = scmp.ne.s32.totalorder %s150, %s153
    %p162 = scmp.eq.s32.totalorder %s16, 23
    %p163 = por %p161, %p162
    %p164 = scmp.ne.s32.totalorder %s153, %s154
    %p165 = scmp.eq.s32.totalorder %s16, 0
    %p166 = por %p164, %p165
    %p167 = scmp.ne.s32.totalorder %s153, %s154
    %p168 = scmp.eq.s32.totalorder %s17, 23
    %p169 = por %p167, %p168
    %p171 = scmp.ne.s32.totalorder %s154, %s170
    %p172 = scmp.eq.s32.totalorder %s17, 0
    %p173 = por %p171, %p172
    %p174 = scmp.le.s32.totalorder 1, %s11
    %p175 = scmp.lt.s32.totalorder %s11, 25
    %p176 = pnand %p174, %p175
    %p177 = pneg %p176
    // Predicated region
    $region9: #{tpu_custom_call.1} parent=5 // pred_check
      _
    $region10: #{tpu_custom_call.1} parent=5 // pred_check_branch
      %179 = sbr.rel (%p176) target = $region12
    $region11: #{tpu_custom_call.1} parent=5 // pred_region
      %s180 = ssub.s32 %s11, 1
      // Predicated region
      $region13: #{tpu_custom_call.1} parent=11 // pred_check
        %p181 = pneg %p96
      $region14: #{tpu_custom_call.1} parent=11 // pred_check_branch
        %183 = sbr.rel (%p181) target = $region16
      $region15: #{tpu_custom_call.1} parent=11 // pred_region
        _
      $region16: #{tpu_custom_call.1} parent=11 // pred_fallthru
        _
      // Predicated region
      $region17: #{tpu_custom_call.1} parent=11 // pred_check
        %p184 = pneg %p117
      $region18: #{tpu_custom_call.1} parent=11 // pred_check_branch
        %186 = sbr.rel (%p184) target = $region20
      $region19: #{tpu_custom_call.1} parent=11 // pred_region
        _
      $region20: #{tpu_custom_call.1} parent=11 // pred_fallthru
        _
      // Predicated region
      $region21: #{tpu_custom_call.1} parent=11 // pred_check
        %p187 = pneg %p138
      $region22: #{tpu_custom_call.1} parent=11 // pred_check_branch
        %189 = sbr.rel (%p187) target = $region24
      $region23: #{tpu_custom_call.1} parent=11 // pred_region
        _
      $region24: #{tpu_custom_call.1} parent=11 // pred_fallthru
        _
    $region12: #{tpu_custom_call.1} parent=5 // pred_fallthru
      _
    %p190 = scmp.lt.s32.totalorder %s11, 24
    // Predicated region
    $region25: #{tpu_custom_call.1} parent=5 // pred_check
      %p191 = pneg %p190
    $region26: #{tpu_custom_call.1} parent=5 // pred_check_branch
      %193 = sbr.rel (%p191) target = $region28
    $region27: #{tpu_custom_call.1} parent=5 // pred_region
      // Predicated region
      $region29: #{tpu_custom_call.1} parent=27 // pred_check
        %p194 = pneg %p43
      $region30: #{tpu_custom_call.1} parent=27 // pred_check_branch
        %196 = sbr.rel (%p194) target = $region32
      $region31: #{tpu_custom_call.1} parent=27 // pred_region
        %p197 = scmp.lt.s32.totalorder %s18, 1
        %s198 = scalar_select %p197, %s18, 1
        %s199 = smul.addr %s198, 8
        %s200 = scalar_lea.vmem %s0, %s199
      $region32: #{tpu_custom_call.1} parent=27 // pred_fallthru
        _
      // Predicated region
      $region33: #{tpu_custom_call.1} parent=27 // pred_check
        %p201 = pneg %p69
      $region34: #{tpu_custom_call.1} parent=27 // pred_check_branch
        %203 = sbr.rel (%p201) target = $region36
      $region35: #{tpu_custom_call.1} parent=27 // pred_region
        %p204 = scmp.lt.s32.totalorder %s19, 11
        %s205 = scalar_select %p204, %s19, 11
        %s206 = smul.addr %s205, 8
        %s207 = scalar_lea.vmem %s1, %s206
      $region36: #{tpu_custom_call.1} parent=27 // pred_fallthru
        _
    $region28: #{tpu_custom_call.1} parent=5 // pred_fallthru
      _
    %p208 = scmp.le.s32.totalorder 1, %s11
    %p209 = scmp.lt.s32.totalorder %s11, 25
    %p210 = pnand %p208, %p209
    %p211 = pneg %p210
    // Predicated region
    $region37: #{tpu_custom_call.1} parent=5 // pred_check
      _
    $region38: #{tpu_custom_call.1} parent=5 // pred_check_branch
      %213 = sbr.rel (%p210) target = $region40
    $region39: #{tpu_custom_call.1} parent=5 // pred_region
      %s214 = ssub.s32 %s11, 1
      %p215 = scmp.lt.s32.totalorder %s20, 1
      %s216 = scalar_select %p215, %s20, 1
      %s217 = smul.addr %s216, 8
      %s218 = scalar_lea.vmem %s0, %s217
      %p219 = pneg %p49
      %p220 = pneg %p46
      %p221 = scmp.lt.s32.totalorder %s21, 11
      %s222 = scalar_select %p221, %s21, 11
      %s223 = smul.addr %s222, 8
      %s224 = scalar_lea.vmem %s1, %s223
      %p225 = pneg %p75
      %p226 = pneg %p72
      %p227 = pneg %p96
      %p228 = pneg %p93
      %p229 = pneg %p117
      %p230 = pneg %p114
      %p231 = pneg %p138
      %p232 = pneg %p135
      %p233 = pneg %p166
      %p234 = pneg %p163
      %p235 = scmp.lt.s32.totalorder %s20, 1
      %s236 = scalar_select %p235, %s20, 1
      %p237 = scmp.lt.s32.totalorder %s21, 11
      %s238 = scalar_select %p237, %s21, 11
      %s239 = smul.addr %s236, 12
      %s240 = sadd.s32 %s238, %s239
      %s241 = smul.addr %s240, 8
      %s242 = scalar_lea.vmem %s5, %s241
      %p243 = scmp.lt.s32.totalorder %s20, 1
      %s244 = scalar_select %p243, %s20, 1
      %s245 = smul.addr %s244, 8
      %s246 = scalar_lea.vmem %s0, %s245
      %p247 = scmp.lt.s32.totalorder %s21, 11
      %s248 = scalar_select %p247, %s21, 11
      %s249 = smul.addr %s248, 8
      %s250 = scalar_lea.vmem %s1, %s249
      %p251 = scmp.lt.s32.totalorder %s20, 1
      %s252 = scalar_select %p251, %s20, 1
      %p253 = scmp.lt.s32.totalorder %s21, 11
      %s254 = scalar_select %p253, %s21, 11
      %s255 = smul.addr %s252, 12
      %s256 = sadd.s32 %s254, %s255
      %s257 = smul.addr %s256, 8
      %s258 = scalar_lea.vmem %s5, %s257
      %v259 = vld [vmem:[%s246] sm:$0xff]
      %v260 = vmul.f32 %v259, %v259
      %vm261 = vcmask 261120
      %v262 = vsel %vm261, %v260, 0.0
      %263 = vadd.xlane.f32.xlu0 %v262
      %v264 = vpop.xlane.xlu0 %263
      %v265 = vrcp.pop 32.0
      %v266 = vmul.f32 %v264, %v265
      %v267 = vadd.f32 %v266, 1e-06
      %v268 = vrsqrt.pop %v267
      %v269 = vmul.f32 %v259, %v268
      %v270 = vld [vmem:[%s2] sm:$0x1]
      %v272 = vlaneseq
      %v273 = vshrl.u32 %v272, 7
      %v274 = vsub.s32 0, %v273
      %v275 = vrot.slane %v270, %v274
      %v277 = vmul.f32 %v269, %v275
      %v278 = vld [vmem:[%s250] sm:$0xff]
      %v280 = vsel %vm261, %v277, 0
      %v283 = vsel %vm261, %v278, 0
      %285 = vmatprep.subr.mxu0 0.0
      %286 = vmatpush1.xpose.msra.mxu0 0.0
      %287 = vmatprep.subr.mxu0 0.0
      %288 = vmatpush1.xpose.msra.mxu0 0.0
      %289 = vmatprep.subr.mxu0 0.0
      %290 = vmatpush1.xpose.msra.mxu0 0.0
      %291 = vmatprep.subr.mxu0 0.0
      %292 = vmatpush1.xpose.msra.mxu0 0.0
      %293 = vmatprep.subr.mxu0 0.0
      %294 = vmatpush1.xpose.msra.mxu0 0.0
      %295 = vmatprep.subr.mxu0 0.0
      %296 = vmatpush1.xpose.msra.mxu0 0.0
      %297 = vmatprep.subr.mxu0 0.0
      %298 = vmatpush1.xpose.msra.mxu0 0.0
      %299 = vmatprep.subr.mxu0 0.0
      %300 = vmatpush1.xpose.msra.mxu0 0.0
      %301 = vmatprep.subr.mxu0 0.0
      %302 = vmatpush1.xpose.msra.mxu0 0.0
      %303 = vmatprep.subr.mxu0 0.0
      %304 = vmatpush1.xpose.msra.mxu0 0.0
      %305 = vmatprep.subr.mxu0 0.0
      %306 = vmatpush1.xpose.msra.mxu0 0.0
      %307 = vmatprep.subr.mxu0 0.0
      %308 = vmatpush1.xpose.msra.mxu0 0.0
      %309 = vmatprep.subr.mxu0 0.0
      %310 = vmatpush1.xpose.msra.mxu0 0.0
      %311 = vmatprep.subr.mxu0 0.0
      %312 = vmatpush1.xpose.msra.mxu0 0.0
      %313 = vmatprep.subr.mxu0 0.0
      %314 = vmatpush1.xpose.msra.mxu0 0.0
      %315 = vmatprep.subr.mxu0 0.0
      %316 = vmatpush1.xpose.msra.mxu0 %v283
      %317 = vmatprep.subr.mxu0 0.0
      %318 = vmatpush2.xpose.msra.mxu0 0.0
      %319 = vmatprep.subr.mxu0 0.0
      %320 = vmatpush2.xpose.msra.mxu0 0.0
      %321 = vmatprep.subr.mxu0 0.0
      %322 = vmatpush2.xpose.msra.mxu0 0.0
      %323 = vmatprep.subr.mxu0 0.0
      %324 = vmatpush2.xpose.msra.mxu0 0.0
      %325 = vmatprep.subr.mxu0 0.0
      %326 = vmatpush2.xpose.msra.mxu0 0.0
      %327 = vmatprep.subr.mxu0 0.0
      %328 = vmatpush2.xpose.msra.mxu0 0.0
      %329 = vmatprep.subr.mxu0 0.0
      %330 = vmatpush2.xpose.msra.mxu0 0.0
      %331 = vmatprep.subr.mxu0 0.0
      %332 = vmatpush2.xpose.msra.mxu0 0.0
      %333 = vmatprep.subr.mxu0 0.0
      %334 = vmatpush2.xpose.msra.mxu0 0.0
      %335 = vmatprep.subr.mxu0 0.0
      %336 = vmatpush2.xpose.msra.mxu0 0.0
      %337 = vmatprep.subr.mxu0 0.0
      %338 = vmatpush2.xpose.msra.mxu0 0.0
      %339 = vmatprep.subr.mxu0 0.0
      %340 = vmatpush2.xpose.msra.mxu0 0.0
      %341 = vmatprep.subr.mxu0 0.0
      %342 = vmatpush2.xpose.msra.mxu0 0.0
      %343 = vmatprep.subr.mxu0 0.0
      %344 = vmatpush2.xpose.msra.mxu0 0.0
      %345 = vmatprep.subr.mxu0 0.0
      %346 = vmatpush2.xpose.msra.mxu0 0.0
      %347 = vmatprep.subr.mxu0 0.0
      %348 = vmatpush2.xpose.msra.mxu0 0.0
      %349 = vmatprep.mubr.f32.mxu0 0.0
      %350 = vmatmul.mubr.f32.gmra.mxu0 %v280
      %v351 = vpop.f32.mrf.mxu0
      %v352 = vadd.f32 0.0, %v351
      %v353 = vpop.f32.mrf.mxu0
      %354 = vdwg.mxu0
      %p355 = scmp.lt.s32.totalorder %s21, 8
      // Predicated region
      $region41: #{tpu_custom_call.1} parent=39 // pred_check
        %p356 = pneg %p355
      $region42: #{tpu_custom_call.1} parent=39 // pred_check_branch
        %358 = sbr.rel (%p356) target = $region44
      $region43: #{tpu_custom_call.1} parent=39 // pred_region
        %360 = vrot.lane.b32.xlu0 %v352, 124
        %v361 = vpop.permute.xlu0 %360
        %363 = vrot.lane.b32.xlu0 %v352, 4
        %v364 = vpop.permute.xlu0 %363
        %vm366 = vcmask 31744
        %v367 = vsel %vm366, %v361, %v364
        %v368 = vld [vmem:[%s3] sm:$0xff]
        %v369 = vmul.f32 %v352, %v368
        %v370 = vld [vmem:[%s4] sm:$0xff]
        %v371 = vmul.f32 %v367, %v370
        %v372 = vadd.f32 %v369, %v371
        %vm373 = vcmask 64512
        %374 = vst.msk [vmem:[%s258] sm:$0xff] %vm373, %v372
      $region44: #{tpu_custom_call.1} parent=39 // pred_fallthru
        _
      %p375 = scmp.ge.s32.totalorder %s21, 8
      // Predicated region
      $region45: #{tpu_custom_call.1} parent=39 // pred_check
        %p376 = pneg %p375
      $region46: #{tpu_custom_call.1} parent=39 // pred_check_branch
        %378 = sbr.rel (%p376) target = $region48
      $region47: #{tpu_custom_call.1} parent=39 // pred_region
        %vm379 = vcmask 64512
        %380 = vst.msk [vmem:[%s258] sm:$0xff] %vm379, %v352
      $region48: #{tpu_custom_call.1} parent=39 // pred_fallthru
        _
      %p381 = scmp.lt.s32.totalorder %s20, 1
      %s382 = scalar_select %p381, %s20, 1
      %p383 = scmp.lt.s32.totalorder %s21, 11
      %s384 = scalar_select %p383, %s21, 11
      %s385 = smul.addr %s382, 12
      %s386 = sadd.s32 %s384, %s385
      %s387 = smul.addr %s386, 8
      %s388 = scalar_lea.vmem %s5, %s387
      // Predicated region
      $region49: #{tpu_custom_call.1} parent=39 // pred_check
        %p389 = pneg %p163
      $region50: #{tpu_custom_call.1} parent=39 // pred_check_branch
        %391 = sbr.rel (%p389) target = $region52
      $region51: #{tpu_custom_call.1} parent=39 // pred_region
        _
      $region52: #{tpu_custom_call.1} parent=39 // pred_fallthru
        _
    $region40: #{tpu_custom_call.1} parent=5 // pred_fallthru
      _
    %p392 = scmp.le.s32.totalorder 2, %s11
    // Predicated region
    $region53: #{tpu_custom_call.1} parent=5 // pred_check
      %p393 = pneg %p392
    $region54: #{tpu_custom_call.1} parent=5 // pred_check_branch
      %395 = sbr.rel (%p393) target = $region56
    $region55: #{tpu_custom_call.1} parent=5 // pred_region
      %s396 = ssub.s32 %s11, 2
      // Predicated region
      $region57: #{tpu_custom_call.1} parent=55 // pred_check
        %p397 = pneg %p169
      $region58: #{tpu_custom_call.1} parent=55 // pred_check_branch
        %399 = sbr.rel (%p397) target = $region60
      $region59: #{tpu_custom_call.1} parent=55 // pred_region
        %p400 = scmp.lt.s32.totalorder %s22, 1
        %s401 = scalar_select %p400, %s22, 1
        %p402 = scmp.lt.s32.totalorder %s23, 11
        %s403 = scalar_select %p402, %s23, 11
        %s404 = smul.addr %s401, 12
        %s405 = sadd.s32 %s403, %s404
        %s406 = smul.addr %s405, 8
        %s407 = scalar_lea.vmem %s5, %s406
      $region60: #{tpu_custom_call.1} parent=55 // pred_fallthru
        _
    $region56: #{tpu_custom_call.1} parent=5 // pred_fallthru
      _
  $region6: #{tpu_custom_call.1} parent=0 // loop_footer
    %s15 = sadd.s32 1, %s11
  $region7: #{tpu_custom_call.1} parent=0 // loop_footer_branch
    %10 = sbr.rel target = $region3
  $region8: #{tpu_custom_call.1} parent=0 // loop_exit
    _

</llo_original>
